<compile_context>
chip_gen: v7x
topology: tpu7x:2x2x1
jax: 0.10.0
libtpu: 0.0.40
codegen_flags: <defaults>
</compile_context>

<pallas_src>
import functools

import jax
import jax.numpy as jnp
from jax.experimental import pallas as pl
from jax.experimental.pallas import tpu as pltpu


def _joints_loss_kernel(tgt_ref, hm_ref, idx_ref, out_ref, *,
                        inv_img_w, inv_img_h, compute_dtype):
    """One grid step = NB heatmaps, each flattened to a lane-dense (HW,) row.

    Per row: softmax over HW, soft-argmax expected (x, y), normalize by the image size,
    smooth-L1 (beta=1) vs. the normalized target; the per-row loss (summed over the two
    coordinates) is written to out_ref.
    """
    hm = hm_ref[...]                                            # native dtype, no wrapper cast
    m = jnp.max(hm, axis=-1, keepdims=True)                     # (NB, 1) lane reduce on native tile
    p = jnp.exp((hm - m).astype(compute_dtype))                 # fused cast+sub+exp -> only p lives

    # One MXU matmul computes [sum(p), sum(p*x_idx), sum(p*y_idx)] for every row:
    # idx_ref columns are [ones, x_idx, y_idx, 0, ..., 0].
    red = jnp.dot(p, idx_ref[...], preferred_element_type=jnp.float32)   # (NB, 128)
    z = red[:, 0:1]
    sx = red[:, 1:2]
    sy = red[:, 2:3]

    inv_z = pl.reciprocal(z)                                    # exact; (NB,1) is tiny
    pred_x = sx * inv_z * inv_img_w                             # preds[..., 0] /= image_size[1]
    pred_y = sy * inv_z * inv_img_h                             # preds[..., 1] /= image_size[0]

    tgt = tgt_ref[...]                                          # (NB, 2) f32
    dx = pred_x - tgt[:, 0:1] * inv_img_w
    dy = pred_y - tgt[:, 1:2] * inv_img_h

    def sl1(d):
        # F.smooth_l1_loss element (beta=1): 0.5*d^2 if |d| < 1 else |d| - 0.5
        ad = jnp.abs(d)
        return jnp.where(ad < 1.0, 0.5 * ad * ad, ad - 0.5)

    out_ref[...] = sl1(dx) + sl1(dy)                            # (NB, 1) per-heatmap loss


def _round_up(x, m):
    return -(-x // m) * m


def _choose_block(n, hw, in_itemsize, compute_itemsize):
    """Pick the per-grid-step row block NB (multiple of 8, never larger than the array)."""
    # Real per-row VMEM footprint: double-buffered native heatmap tile + compute-dtype exp
    # tile (MXU LHS) + (NB,128) matmul result + lane-padded (->128) targets/output, dbuf.
    per_row = (2 * hw * in_itemsize
               + hw * compute_itemsize
               + 128 * 4
               + 2 * 2 * 128 * 4)
    budget = 8 * 1024 * 1024          # conservative: total stays inside v5e/v7x scoped VMEM
    nb_max = max(8, min(4096, (budget // per_row) // 8 * 8))

    n_cap = max(8, (n // 8) * 8)      # block_shape must not exceed the (>=8-row) array
    n8 = _round_up(max(n, 8), 8)

    if n8 <= nb_max:
        # Fits in one block: split into two balanced blocks when there is enough work so
        # the "parallel" axis shards across v7x's two TensorCores and DMA overlaps compute.
        nb = _round_up(-(-n8 // 2), 8) if n8 >= 64 else n8
    else:
        g = -(-n8 // nb_max)
        if g % 2:
            g += 1                    # even grid length -> balanced megacore sharding
        nb = _round_up(-(-n8 // g), 8)
    return int(min(nb, n_cap))


def joints_coordinate_loss(output, target, target_weight=None,
                           image_size=(384, 288), loss_type="sl1",
                           bf16_compute=None):
    """Forward of JointsCoordinateLoss.

    output: (B, J, H, W) heatmaps (kept in native dtype for the DMA; cast in-kernel),
    target: (B, J, 2) pixel coords. target_weight is unused for loss_type='sl1'
    (matches the PyTorch module).
    bf16_compute: run exp + matmul in bf16 (only worthwhile on v6e/v7x; pass False on v5e).
    """
    assert loss_type == "sl1"  # TODO(synk): 'wing' loss is NotImplementedError in the reference too.
    B, J, H, W = output.shape
    N = B * J
    HW = H * W

    if bf16_compute is None:
        bf16_compute = output.dtype == jnp.bfloat16
    if bf16_compute and max(H, W) > 256:
        bf16_compute = False          # keep soft-argmax index values exactly representable
    compute_dtype = jnp.bfloat16 if bf16_compute else jnp.float32
    in_itemsize = jnp.dtype(output.dtype).itemsize
    compute_itemsize = jnp.dtype(compute_dtype).itemsize

    hm = output.reshape(N, HW)                       # lane-dense rows, native dtype
    tgt = target.reshape(N, 2).astype(jnp.float32)

    # Only pad when there are fewer than 8 heatmaps (block row dim must be >= 8).
    N_rows = max(N, 8)
    if N_rows != N:
        hm = jnp.pad(hm, ((0, N_rows - N), (0, 0)))
        tgt = jnp.pad(tgt, ((0, N_rows - N), (0, 0)))

    NB = _choose_block(N_rows, HW, in_itemsize, compute_itemsize)
    G = -(-N_rows // NB)                             # ragged tail handled by the pipeline

    # Constant index matrix: columns [ones, x_idx (= flat % W), y_idx (= flat // W), 0...].
    flat = jnp.arange(HW, dtype=jnp.int32)
    idx_mat = jnp.zeros((HW, 128), compute_dtype)
    idx_mat = idx_mat.at[:, 0].set(jnp.ones((HW,), compute_dtype))
    idx_mat = idx_mat.at[:, 1].set((flat % W).astype(compute_dtype))
    idx_mat = idx_mat.at[:, 2].set((flat // W).astype(compute_dtype))

    # Explicit VMEM accounting -> explicit scoped-VMEM limit (keeps double-buffering on
    # v5e's 16 MiB default scope and well within v7x's 64 MiB physical VMEM).
    vmem_bytes = (2 * NB * HW * in_itemsize          # heatmap tile, double buffered
                  + NB * HW * compute_itemsize       # exp tile (MXU LHS)
                  + 2 * HW * 128 * compute_itemsize  # idx matrix (double buffered)
                  + NB * 128 * 4                     # matmul result
                  + 2 * NB * 128 * 4                 # (NB,2) targets, lane padded, dbuf
                  + 2 * NB * 128 * 4                 # (NB,1) output, lane padded, dbuf
                  + (2 << 20))                       # headroom for small temps / spills
    vmem_limit = int(min(max(vmem_bytes, 4 << 20), 48 << 20))

    kernel = functools.partial(
        _joints_loss_kernel,
        inv_img_w=1.0 / float(image_size[1]),
        inv_img_h=1.0 / float(image_size[0]),
        compute_dtype=compute_dtype,
    )

    per_row = pl.pallas_call(
        kernel,
        out_shape=jax.ShapeDtypeStruct((N_rows, 1), jnp.float32),
        grid=(G,),
        in_specs=[
            pl.BlockSpec((NB, 2), lambda g: (g, 0)),       # targets (VMEM)
            pl.BlockSpec((NB, HW), lambda g: (g, 0)),      # NB lane-dense heatmap rows
            pl.BlockSpec((HW, 128), lambda g: (0, 0)),     # constant index matrix, fetched once
        ],
        out_specs=pl.BlockSpec((NB, 1), lambda g: (g, 0)),
        compiler_params=pltpu.CompilerParams(
            dimension_semantics=("parallel",),             # independent blocks -> megacore friendly
            vmem_limit_bytes=vmem_limit),
    )(tgt, hm, idx_mat)

    # Mean over all B*J*2 smooth-L1 elements.
    return jnp.sum(per_row[:N, 0]) / (N * 2.0)


def _reference(output, target, image_size=(384, 288)):
    """Pure-JAX reference mirroring the PyTorch forward exactly."""
    B, J, H, W = output.shape
    p = jax.nn.softmax(output.reshape(B, J, H * W).astype(jnp.float32), axis=2)
    p = p.reshape(B, J, H, W)
    x = (p.sum(axis=2) * jnp.arange(W, dtype=jnp.float32)).sum(axis=2)
    y = (p.sum(axis=3) * jnp.arange(H, dtype=jnp.float32)).sum(axis=2)
    preds = jnp.stack([x / image_size[1], y / image_size[0]], axis=2)
    tgt = jnp.stack([target[:, :, 0] / image_size[1],
                     target[:, :, 1] / image_size[0]], axis=2)
    d = jnp.abs(preds - tgt)
    return jnp.where(d < 1.0, 0.5 * d * d, d - 0.5).mean()


if __name__ == "__main__":
    key = jax.random.PRNGKey(0)
    k1, k2, k3, k4 = jax.random.split(key, 4)

    # Main check: B*J divides the block exactly.
    B, J, H, W = 2, 4, 16, 16
    output = jax.random.normal(k1, (B, J, H, W), jnp.float32) * 3.0
    target = jax.random.uniform(k2, (B, J, 2), jnp.float32, minval=0.0, maxval=16.0)
    target_weight = jnp.ones((B, J, 1), jnp.float32)  # unused for 'sl1'

    loss = joints_coordinate_loss(output, target, target_weight)
    jax.block_until_ready(loss)
    ref = _reference(output, target)
    assert abs(float(loss) - float(ref)) < 1e-4, (float(loss), float(ref))

    # Ragged check: N = 10 is not a multiple of the 8-row block -> exercises the
    # no-pad path (clamped tail reads, dropped tail writes).
    B2, J2 = 2, 5
    output2 = jax.random.normal(k3, (B2, J2, H, W), jnp.float32) * 3.0
    target2 = jax.random.uniform(k4, (B2, J2, 2), jnp.float32, minval=0.0, maxval=16.0)
    loss2 = joints_coordinate_loss(output2, target2)
    jax.block_until_ready(loss2)
    ref2 = _reference(output2, target2)
    assert abs(float(loss2) - float(ref2)) < 1e-4, (float(loss2), float(ref2))

    print("KERNEL_OK")
</pallas_src>

<mosaic_0001>
module attributes {stable_mosaic.version = 11 : i64} {
  func.func @_joints_loss_kernel(%arg0: i32, %arg1: memref<8x2xf32, #tpu.memory_space<vmem>>, %arg2: memref<8x256xf32, #tpu.memory_space<vmem>>, %arg3: memref<256x128xf32, #tpu.memory_space<vmem>>, %arg4: memref<8x1xf32, #tpu.memory_space<vmem>>) attributes {dimension_semantics = [#tpu.dimension_semantics<parallel>], iteration_bounds = array<i64: 1>, scalar_prefetch = 0 : i64, scratch_operands = 0 : i64, tpu.core_type = #tpu.core_type<tc>, window_params = [{transform_indices = @transform_0, window_bounds = array<i64: 8, 2>}, {transform_indices = @transform_1, window_bounds = array<i64: 8, 256>}, {pipeline_mode = #tpu.pipeline_mode<synchronous>, transform_indices = @transform_2, window_bounds = array<i64: 256, 128>}, {transform_indices = @transform_3, window_bounds = array<i64: 8, 1>}]} {
    %c0 = arith.constant 0 : index
    %c0_0 = arith.constant 0 : index
    %0 = vector.load %arg2[%c0, %c0_0] : memref<8x256xf32, #tpu.memory_space<vmem>>, vector<8x256xf32>
    %cst = arith.constant dense<0xFF800000> : vector<8xf32>
    %1 = vector.multi_reduction <maximumf>, %0, %cst [1] : vector<8x256xf32> to vector<8xf32>
    %2 = vector.shape_cast %1 : vector<8xf32> to vector<8x1xf32>
    %3 = vector.broadcast %2 : vector<8x1xf32> to vector<8x256xf32>
    %4 = arith.subf %0, %3 : vector<8x256xf32>
    %5 = math.exp %4 : vector<8x256xf32>
    %c0_1 = arith.constant 0 : index
    %c0_2 = arith.constant 0 : index
    %6 = vector.load %arg3[%c0_1, %c0_2] : memref<256x128xf32, #tpu.memory_space<vmem>>, vector<256x128xf32>
    %cst_3 = arith.constant dense<0.000000e+00> : vector<8x128xf32>
    %7 = tpu.matmul %5, %6, %cst_3 {dimension_numbers = #tpu.dot_dimension_numbers<[1], [0], [0], [1], [0, 0, 1, 1], [], []>} : vector<8x256xf32>, vector<256x128xf32>, vector<8x128xf32> -> vector<8x128xf32>
    %8 = vector.extract_strided_slice %7 {offsets = [0, 0], sizes = [8, 1], strides = [1, 1]} : vector<8x128xf32> to vector<8x1xf32>
    %9 = vector.extract_strided_slice %7 {offsets = [0, 1], sizes = [8, 1], strides = [1, 1]} : vector<8x128xf32> to vector<8x1xf32>
    %10 = vector.extract_strided_slice %7 {offsets = [0, 2], sizes = [8, 1], strides = [1, 1]} : vector<8x128xf32> to vector<8x1xf32>
    %11 = tpu.reciprocal %8 : vector<8x1xf32> -> vector<8x1xf32>
    %12 = arith.mulf %9, %11 : vector<8x1xf32>
    %cst_4 = arith.constant 0.00347222225 : f32
    %13 = vector.broadcast %cst_4 : f32 to vector<8x1xf32>
    %14 = arith.mulf %12, %13 : vector<8x1xf32>
    %15 = arith.mulf %10, %11 : vector<8x1xf32>
    %cst_5 = arith.constant 0.00260416674 : f32
    %16 = vector.broadcast %cst_5 : f32 to vector<8x1xf32>
    %17 = arith.mulf %15, %16 : vector<8x1xf32>
    %c0_6 = arith.constant 0 : index
    %c0_7 = arith.constant 0 : index
    %18 = vector.load %arg1[%c0_6, %c0_7] : memref<8x2xf32, #tpu.memory_space<vmem>>, vector<8x2xf32>
    %19 = vector.extract_strided_slice %18 {offsets = [0, 0], sizes = [8, 1], strides = [1, 1]} : vector<8x2xf32> to vector<8x1xf32>
    %cst_8 = arith.constant 0.00347222225 : f32
    %20 = vector.broadcast %cst_8 : f32 to vector<8x1xf32>
    %21 = arith.mulf %19, %20 : vector<8x1xf32>
    %22 = arith.subf %14, %21 : vector<8x1xf32>
    %23 = vector.extract_strided_slice %18 {offsets = [0, 1], sizes = [8, 1], strides = [1, 1]} : vector<8x2xf32> to vector<8x1xf32>
    %cst_9 = arith.constant 0.00260416674 : f32
    %24 = vector.broadcast %cst_9 : f32 to vector<8x1xf32>
    %25 = arith.mulf %23, %24 : vector<8x1xf32>
    %26 = arith.subf %17, %25 : vector<8x1xf32>
    %27 = math.absf %22 : vector<8x1xf32>
    %cst_10 = arith.constant 1.000000e+00 : f32
    %28 = vector.broadcast %cst_10 : f32 to vector<8x1xf32>
    %29 = arith.cmpf olt, %27, %28 : vector<8x1xf32>
    %cst_11 = arith.constant 5.000000e-01 : f32
    %30 = vector.broadcast %cst_11 : f32 to vector<8x1xf32>
    %31 = arith.mulf %30, %27 : vector<8x1xf32>
    %32 = arith.mulf %31, %27 : vector<8x1xf32>
    %cst_12 = arith.constant 5.000000e-01 : f32
    %33 = vector.broadcast %cst_12 : f32 to vector<8x1xf32>
    %34 = arith.subf %27, %33 : vector<8x1xf32>
    %35 = arith.select %29, %32, %34 : vector<8x1xi1>, vector<8x1xf32>
    %36 = math.absf %26 : vector<8x1xf32>
    %cst_13 = arith.constant 1.000000e+00 : f32
    %37 = vector.broadcast %cst_13 : f32 to vector<8x1xf32>
    %38 = arith.cmpf olt, %36, %37 : vector<8x1xf32>
    %cst_14 = arith.constant 5.000000e-01 : f32
    %39 = vector.broadcast %cst_14 : f32 to vector<8x1xf32>
    %40 = arith.mulf %39, %36 : vector<8x1xf32>
    %41 = arith.mulf %40, %36 : vector<8x1xf32>
    %cst_15 = arith.constant 5.000000e-01 : f32
    %42 = vector.broadcast %cst_15 : f32 to vector<8x1xf32>
    %43 = arith.subf %36, %42 : vector<8x1xf32>
    %44 = arith.select %38, %41, %43 : vector<8x1xi1>, vector<8x1xf32>
    %45 = arith.addf %35, %44 : vector<8x1xf32>
    %c0_16 = arith.constant 0 : index
    %c0_17 = arith.constant 0 : index
    %46 = vector.load %arg4[%c0_16, %c0_17] : memref<8x1xf32, #tpu.memory_space<vmem>>, vector<8x1xf32>
    tpu.vector_store %arg4[%c0_16, %c0_17], %45 {strides = array<i32>} : memref<8x1xf32, #tpu.memory_space<vmem>>, vector<8x1xf32>,
    return
  }
  func.func @transform_0(%arg0: i32) -> (i32, i32) {
    %c0_i32 = arith.constant 0 : i32
    %c0_i32_0 = arith.constant 0 : i32
    return %arg0, %c0_i32 : i32, i32
  }
  func.func @transform_1(%arg0: i32) -> (i32, i32) {
    %c0_i32 = arith.constant 0 : i32
    %c0_i32_0 = arith.constant 0 : i32
    return %arg0, %c0_i32 : i32, i32
  }
  func.func @transform_2(%arg0: i32) -> (i32, i32) {
    %c0_i32 = arith.constant 0 : i32
    %c0_i32_0 = arith.constant 0 : i32
    %c0_i32_1 = arith.constant 0 : i32
    return %c0_i32, %c0_i32_0 : i32, i32
  }
  func.func @transform_3(%arg0: i32) -> (i32, i32) {
    %c0_i32 = arith.constant 0 : i32
    %c0_i32_0 = arith.constant 0 : i32
    return %arg0, %c0_i32 : i32, i32
  }
}

</mosaic_0001>

<llo_original>
// kernel: tpu_custom_call.1
$region0: #{tpu_custom_call.1}
  #allocation0 [shape = 'u32[]', space=smem, size = 0x4, offset = 0x4, fixed_abs, tag = 'smem constant byte address 0x4 - core index']
  #allocation1 [shape = 'u32[144,128]{1,0:T(1,128)}', space=vmem, size = 0x12000, scoped, tag = 'internal scratch']
  %s0 = inlined_call_operand.vmem [shape: f32[8,2], index: 0, kind: input, shape index: {}]
  %s1 = inlined_call_operand.hbm [shape: f32[8,256], index: 1, kind: input, shape index: {}]
  %s2 = inlined_call_operand.hbm [shape: f32[256,128], index: 2, kind: input, shape index: {}]
  %s3 = inlined_call_operand.vmem [shape: f32[8,1], index: 3, kind: output, shape index: {}]
  %s4 = sld [smem:[#allocation0]]
  $region30: #{tpu_custom_call.1} parent=0
    _
  %s6 = ssub.s32 1, %s4
  %s7 = scalar_select 0, %s6, %s4
  $region1: #{tpu_custom_call.1} parent=0
    #allocation2 [shape = 'u8[8192]{0}', space=vmem, size = 0x2000, scoped, tag = 'input window, operand 1, single buffered']
    #allocation3 [shape = 's32[1]{0}', space=sflag, size = 0x4, scoped, tag = 'scoped memory for tpu_custom_call.1']
    #allocation4 [shape = 'u8[131072]{0}', space=vmem, size = 0x20000, scoped, tag = 'input window, operand 2, single buffered']
    #allocation5 [shape = 's32[1]{0}', space=sflag, size = 0x4, scoped, tag = 'scoped memory for tpu_custom_call.1']
    %8 = vsyncpa [#allocation3], 0
    %9 = vsyncpa [#allocation5], 0
    // Predicated region
    $region2: #{tpu_custom_call.1} parent=1 // pred_check
      _
    $region3: #{tpu_custom_call.1} parent=1 // pred_check_branch
      %11 = sbr.rel (0) target = $region5
    $region4: #{tpu_custom_call.1} parent=1 // pred_region
      _
    $region5: #{tpu_custom_call.1} parent=1 // pred_fallthru
      _
    // Predicated region
    $region6: #{tpu_custom_call.1} parent=1 // pred_check
      _
    $region7: #{tpu_custom_call.1} parent=1 // pred_check_branch
      %13 = sbr.rel (0) target = $region9
    $region8: #{tpu_custom_call.1} parent=1 // pred_region
      %s15 = ssub.s32 256, 256
      %16 = vsyncadd [#allocation3], %s15
      %s18 = sshll.u32 [#allocation2], 4
      %s19 = int_to_ptr.vmem [resolvable:$true] %s18
      %21 = dma.hbm_to_vmem [thread:$0]  %s1, 256, %s19, [#allocation3]
    $region9: #{tpu_custom_call.1} parent=1 // pred_fallthru
      _
    // Predicated region
    $region10: #{tpu_custom_call.1} parent=1 // pred_check
      _
    $region11: #{tpu_custom_call.1} parent=1 // pred_check_branch
      %23 = sbr.rel (0) target = $region13
    $region12: #{tpu_custom_call.1} parent=1 // pred_region
      %s25 = ssub.s32 4096, 4096
      %26 = vsyncadd [#allocation5], %s25
      %s27 = sshll.u32 [#allocation4], 4
      %s28 = int_to_ptr.vmem [resolvable:$true] %s27
      %33 = dma.hbm_to_vmem [thread:$0]  %s2, 4096, %s28, [#allocation5], 128, 128, 8
    $region13: #{tpu_custom_call.1} parent=1 // pred_fallthru
      _
    // Predicated region
    $region14: #{tpu_custom_call.1} parent=1 // pred_check
      _
    $region15: #{tpu_custom_call.1} parent=1 // pred_check_branch
      %35 = sbr.rel (0) target = $region17
    $region16: #{tpu_custom_call.1} parent=1 // pred_region
      %36 = dma.done [#allocation3], 256
    $region17: #{tpu_custom_call.1} parent=1 // pred_fallthru
      _
    // Predicated region
    $region18: #{tpu_custom_call.1} parent=1 // pred_check
      _
    $region19: #{tpu_custom_call.1} parent=1 // pred_check_branch
      %38 = sbr.rel (0) target = $region21
    $region20: #{tpu_custom_call.1} parent=1 // pred_region
      %39 = dma.done [#allocation5], 4096
    $region21: #{tpu_custom_call.1} parent=1 // pred_fallthru
      _
    %v40 = vld [vmem:[#allocation2] sm:$0xff]
    %v41 = vld [vmem:[#allocation2 + $0x8] sm:$0xff]
    %v42 = vmax.f32 %v40, %v41
    %43 = vmax.xlane.f32.xlu0 %v42
    %v44 = vpop.xlane.xlu0 %43
    %v45 = vsub.f32 %v40, %v44
    %v46 = vsub.f32 %v41, %v44
    %v47 = vmul.f32 %v45, 1.442695
    %v48 = vpow.pop %v47
    %v49 = vmul.f32 %v46, 1.442695
    %v50 = vpow.pop %v49
    %v51 = vld [vmem:[#allocation4] sm:$0xff]
    %v52 = vld [vmem:[#allocation4 + $0x8] sm:$0xff]
    %v53 = vld [vmem:[#allocation4 + $0x10] sm:$0xff]
    %v54 = vld [vmem:[#allocation4 + $0x18] sm:$0xff]
    %v55 = vld [vmem:[#allocation4 + $0x20] sm:$0xff]
    %v56 = vld [vmem:[#allocation4 + $0x28] sm:$0xff]
    %v57 = vld [vmem:[#allocation4 + $0x30] sm:$0xff]
    %v58 = vld [vmem:[#allocation4 + $0x38] sm:$0xff]
    %v59 = vld [vmem:[#allocation4 + $0x40] sm:$0xff]
    %v60 = vld [vmem:[#allocation4 + $0x48] sm:$0xff]
    %v61 = vld [vmem:[#allocation4 + $0x50] sm:$0xff]
    %v62 = vld [vmem:[#allocation4 + $0x58] sm:$0xff]
    %v63 = vld [vmem:[#allocation4 + $0x60] sm:$0xff]
    %v64 = vld [vmem:[#allocation4 + $0x68] sm:$0xff]
    %v65 = vld [vmem:[#allocation4 + $0x70] sm:$0xff]
    %v66 = vld [vmem:[#allocation4 + $0x78] sm:$0xff]
    %v67 = vld [vmem:[#allocation4 + $0x80] sm:$0xff]
    %v68 = vld [vmem:[#allocation4 + $0x88] sm:$0xff]
    %v69 = vld [vmem:[#allocation4 + $0x90] sm:$0xff]
    %v70 = vld [vmem:[#allocation4 + $0x98] sm:$0xff]
    %v71 = vld [vmem:[#allocation4 + $0xa0] sm:$0xff]
    %v72 = vld [vmem:[#allocation4 + $0xa8] sm:$0xff]
    %v73 = vld [vmem:[#allocation4 + $0xb0] sm:$0xff]
    %v74 = vld [vmem:[#allocation4 + $0xb8] sm:$0xff]
    %v75 = vld [vmem:[#allocation4 + $0xc0] sm:$0xff]
    %v76 = vld [vmem:[#allocation4 + $0xc8] sm:$0xff]
    %v77 = vld [vmem:[#allocation4 + $0xd0] sm:$0xff]
    %v78 = vld [vmem:[#allocation4 + $0xd8] sm:$0xff]
    %v79 = vld [vmem:[#allocation4 + $0xe0] sm:$0xff]
    %v80 = vld [vmem:[#allocation4 + $0xe8] sm:$0xff]
    %v81 = vld [vmem:[#allocation4 + $0xf0] sm:$0xff]
    %v82 = vld [vmem:[#allocation4 + $0xf8] sm:$0xff]
    %83 = vmatprep.subr.mxu0 0.0
    %84 = vmatpush1.msra.mxu0 %v51
    %85 = vmatprep.subr.mxu0 0.0
    %86 = vmatpush1.msra.mxu0 %v52
    %87 = vmatprep.subr.mxu0 0.0
    %88 = vmatpush1.msra.mxu0 %v53
    %89 = vmatprep.subr.mxu0 0.0
    %90 = vmatpush1.msra.mxu0 %v54
    %91 = vmatprep.subr.mxu0 0.0
    %92 = vmatpush1.msra.mxu0 %v55
    %93 = vmatprep.subr.mxu0 0.0
    %94 = vmatpush1.msra.mxu0 %v56
    %95 = vmatprep.subr.mxu0 0.0
    %96 = vmatpush1.msra.mxu0 %v57
    %97 = vmatprep.subr.mxu0 0.0
    %98 = vmatpush1.msra.mxu0 %v58
    %99 = vmatprep.subr.mxu0 0.0
    %100 = vmatpush1.msra.mxu0 %v59
    %101 = vmatprep.subr.mxu0 0.0
    %102 = vmatpush1.msra.mxu0 %v60
    %103 = vmatprep.subr.mxu0 0.0
    %104 = vmatpush1.msra.mxu0 %v61
    %105 = vmatprep.subr.mxu0 0.0
    %106 = vmatpush1.msra.mxu0 %v62
    %107 = vmatprep.subr.mxu0 0.0
    %108 = vmatpush1.msra.mxu0 %v63
    %109 = vmatprep.subr.mxu0 0.0
    %110 = vmatpush1.msra.mxu0 %v64
    %111 = vmatprep.subr.mxu0 0.0
    %112 = vmatpush1.msra.mxu0 %v65
    %113 = vmatprep.subr.mxu0 0.0
    %114 = vmatpush1.msra.mxu0 %v66
    %115 = vmatprep.subr.mxu0 0.0
    %116 = vmatpush1.msra.mxu0 %v67
    %117 = vmatprep.subr.mxu0 0.0
    %118 = vmatpush1.msra.mxu0 %v68
    %119 = vmatprep.subr.mxu0 0.0
    %120 = vmatpush1.msra.mxu0 %v69
    %121 = vmatprep.subr.mxu0 0.0
    %122 = vmatpush1.msra.mxu0 %v70
    %123 = vmatprep.subr.mxu0 0.0
    %124 = vmatpush1.msra.mxu0 %v71
    %125 = vmatprep.subr.mxu0 0.0
    %126 = vmatpush1.msra.mxu0 %v72
    %127 = vmatprep.subr.mxu0 0.0
    %128 = vmatpush1.msra.mxu0 %v73
    %129 = vmatprep.subr.mxu0 0.0
    %130 = vmatpush1.msra.mxu0 %v74
    %131 = vmatprep.subr.mxu0 0.0
    %132 = vmatpush1.msra.mxu0 %v75
    %133 = vmatprep.subr.mxu0 0.0
    %134 = vmatpush1.msra.mxu0 %v76
    %135 = vmatprep.subr.mxu0 0.0
    %136 = vmatpush1.msra.mxu0 %v77
    %137 = vmatprep.subr.mxu0 0.0
    %138 = vmatpush1.msra.mxu0 %v78
    %139 = vmatprep.subr.mxu0 0.0
    %140 = vmatpush1.msra.mxu0 %v79
    %141 = vmatprep.subr.mxu0 0.0
    %142 = vmatpush1.msra.mxu0 %v80
    %143 = vmatprep.subr.mxu0 0.0
    %144 = vmatpush1.msra.mxu0 %v81
    %145 = vmatprep.subr.mxu0 0.0
    %146 = vmatpush1.msra.mxu0 %v82
    %147 = vmatprep.mubr.f32.mxu0 %v50
    %148 = vmatmul.mubr.f32.gmra.mrb[0].mxu0 %v48
    %v149 = vpop.f32.mrb[0].mxu0
    %v150 = vadd.f32 0.0, %v149
    %v151 = vpop.f32.mrb[0].mxu0
    %152 = vdwg.mxu0
    %v153 = vrcp.pop %v150
    %155 = vrot.lane.b32.xlu0 %v153, 1
    %v156 = vpop.permute.xlu0 %155
    %v158 = vmul.f32 %v150, %v156
    %v159 = vmul.f32 %v158, 0.0034722222
    %160 = vrot.lane.b32.xlu0 %v153, 2
    %v161 = vpop.permute.xlu0 %160
    %v163 = vmul.f32 %v150, %v161
    %v164 = vmul.f32 %v163, 0.0026041667
    %v165 = vld [vmem:[%s0] sm:$0xff]
    %v166 = vmul.f32 %v165, 0.0034722222
    %168 = vrot.lane.b32.xlu0 %v166, 1
    %v169 = vpop.permute.xlu0 %168
    %v171 = vsub.f32 %v159, %v169
    %v172 = vmul.f32 %v165, 0.0026041667
    %174 = vrot.lane.b32.xlu0 %v172, 1
    %v175 = vpop.permute.xlu0 %174
    %v177 = vsub.f32 %v164, %v175
    %v178 = vand.u32 2147483647, %v171
    %vm179 = vcmp.lt.f32.partialorder %v178, 1.0
    %v180 = vmul.f32 %v178, 0.5
    %v181 = vmul.f32 %v180, %v178
    %v182 = vsub.f32 %v178, 0.5
    %v183 = vsel %vm179, %v181, %v182
    %v184 = vand.u32 2147483647, %v177
    %vm185 = vcmp.lt.f32.partialorder %v184, 1.0
    %v186 = vmul.f32 %v184, 0.5
    %v187 = vmul.f32 %v186, %v184
    %v188 = vsub.f32 %v184, 0.5
    %v189 = vsel %vm185, %v187, %v188
    %191 = vrot.lane.b32.xlu0 %v189, 127
    %v192 = vpop.permute.xlu0 %191
    %v194 = vadd.f32 %v183, %v192
    %196 = vrot.lane.b32.xlu0 %v194, 127
    %v197 = vpop.permute.xlu0 %196
    %vm199 = vcmask 7168
    %200 = vst.msk [vmem:[%s3] sm:$0xff] %vm199, %v197
    // Predicated region
    $region22: #{tpu_custom_call.1} parent=1 // pred_check
      _
    $region23: #{tpu_custom_call.1} parent=1 // pred_check_branch
      %202 = sbr.rel (0) target = $region25
    $region24: #{tpu_custom_call.1} parent=1 // pred_region
      _
    $region25: #{tpu_custom_call.1} parent=1 // pred_fallthru
      _
    // Predicated region
    $region26: #{tpu_custom_call.1} parent=1 // pred_check
      _
    $region27: #{tpu_custom_call.1} parent=1 // pred_check_branch
      %204 = sbr.rel (0) target = $region29
    $region28: #{tpu_custom_call.1} parent=1 // pred_region
      _
    $region29: #{tpu_custom_call.1} parent=1 // pred_fallthru
      _
    %205 = vsyncpa [#allocation3], 1
    %206 = vsyncpa [#allocation5], 1

</llo_original>
